<compile_context>
chip_gen: v7x
topology: tpu7x:2x2x1
jax: 0.10.0
libtpu: 0.0.40
codegen_flags: <defaults>
</compile_context>

<pallas_src>
import functools

import jax
import jax.numpy as jnp
from jax.experimental import pallas as pl
from jax.experimental.pallas import tpu as pltpu


def _cdiv(a, b):
    return -(-a // b)


def _round_up(x, m):
    return _cdiv(x, m) * m


def corr2d_kernel(x_ref, w_ref, b_ref, o_ref, *, kh, kw, chunk):
    """Batched cross-correlation on lane-packed image planes.

    x_ref : (b_blk, h,  L) VMEM  each (h, L) plane holds g images side by side
                                 along the 128-lane axis (lane stride = w)
    w_ref : (kh*kw,)       SMEM  flattened kernel weights (scalar reads)
    b_ref : (1,)           SMEM  scalar bias
    o_ref : (b_blk, oh, L) VMEM  valid output rows only; per-image valid
                                 columns [0, ow) are sliced in the wrapper
    """
    b_blk, h, L = x_ref.shape
    oh = o_ref.shape[1]
    n_chunks = b_blk // chunk          # wrapper guarantees exact divisibility
    bias = b_ref[0]

    # Chunked plane loop: keeps live values to a few vregs per step instead of
    # materialising the whole (b_blk, h, L) block expression (vreg pressure).
    @pl.loop(0, n_chunks)
    def _(c):
        base = pl.multiple_of(c * chunk, chunk)
        for u in range(chunk):                          # static unroll
            p = base + u
            acc = None
            for di in range(kh):                        # static unroll
                # Row shift via a sublane-offset load (vld slots), not an
                # axis-0 roll on the XLU.
                x_rows = x_ref[p, pl.ds(di, oh), :]     # (oh, L)
                part = x_rows * w_ref[di * kw]
                for dj in range(1, kw):                 # static unroll
                    # Left lane-rotate by dj (XLU).  Wrapped / neighbour-image
                    # lanes only land in columns >= ow of each image, which
                    # the wrapper discards (lane stride == w >= kw).
                    tap = pltpu.roll(x_rows, shift=L - dj, axis=1)
                    part = part + tap * w_ref[di * kw + dj]
                # One partial accumulator per kernel row: the kh chains are
                # independent, only the final adds serialise.
                acc = part if acc is None else acc + part
            o_ref[p, :, :] = acc + bias


def conv2d_pallas(x, weight, bias):
    """Forward of the PyTorch Conv2D module: corr2d(x, weight) + bias.

    Accepts one image (h, w) or a batch (n, h, w).
    """
    squeeze = x.ndim == 2
    if squeeze:
        x = x[None]
    n, h, w = x.shape
    kh, kw = weight.shape
    # Degenerate shapes (kernel larger than the input) are not supported.
    assert 1 <= kh <= h and 1 <= kw <= w, (kh, kw, h, w)
    oh, ow = h - kh + 1, w - kw + 1

    # ---- lane packing: g images per plane, lane stride = w -----------------
    g = max(1, 128 // w)
    L = _round_up(g * w, 128)          # lane-dense plane width

    # ---- batch blocking -----------------------------------------------------
    tiles_per_plane = _cdiv(h, 8)
    chunk = max(1, 8 // tiles_per_plane)          # planes per in-kernel chunk
    try:
        vmem_cap = pltpu.get_tpu_info().vmem_capacity_bytes
    except Exception:                              # interpret mode / no TPU info
        vmem_cap = 64 * 1024 * 1024                # v7x per-TC VMEM (smallest)
    # ~1-2 MiB per input block: >=512 KiB amortises the ~0.35us/step pipeline
    # overhead; 2 x (in + out) double buffers stay well under the scoped-VMEM
    # defaults of v5e (16 MiB) and v6e/v7x (32 MiB).
    block_budget = min(2 * 1024 * 1024, vmem_cap // 32)
    plane_bytes = h * L * 4
    b_blk_max = max(1, block_budget // plane_bytes)

    n_planes = _cdiv(n, g)
    n_steps = _cdiv(n_planes, b_blk_max)
    if n_steps == 1 and n_planes >= 2:
        n_steps = 2               # >=2 grid steps lets v7x shard over its 2 TCs
    b_blk_target = _cdiv(n_planes, n_steps)
    chunk = min(chunk, b_blk_target)               # don't round tiny problems up
    b_blk = _round_up(b_blk_target, chunk)
    n_blk = n_steps * b_blk                        # grid * block covers exactly
    n_pad = n_blk * g

    # Single dense pack (pad batch + transpose) -> no per-image (8,128) padding.
    xf = jnp.pad(x.astype(jnp.float32), ((0, n_pad - n), (0, 0), (0, 0)))
    x_packed = (xf.reshape(n_blk, g, h, w)
                  .transpose(0, 2, 1, 3)
                  .reshape(n_blk, h, g * w))
    if g * w < L:
        x_packed = jnp.pad(x_packed, ((0, 0), (0, 0), (0, L - g * w)))

    # 1-D SMEM weights/bias avoid the (8,128)-word padding of 2-D SMEM allocs.
    w_flat = weight.reshape(-1).astype(jnp.float32)
    b_vec = bias.reshape(-1).astype(jnp.float32)

    kernel = functools.partial(corr2d_kernel, kh=kh, kw=kw, chunk=chunk)

    out_packed = pl.pallas_call(
        kernel,
        grid=(n_steps,),
        out_shape=jax.ShapeDtypeStruct((n_blk, oh, L), jnp.float32),
        in_specs=[
            pl.BlockSpec((b_blk, h, L), lambda i: (i, 0, 0)),      # images
            pl.BlockSpec(memory_space=pltpu.MemorySpace.SMEM),     # weights
            pl.BlockSpec(memory_space=pltpu.MemorySpace.SMEM),     # bias
        ],
        out_specs=pl.BlockSpec((b_blk, oh, L), lambda i: (i, 0, 0)),
        compiler_params=pltpu.CompilerParams(
            dimension_semantics=("parallel",)),
    )(x_packed, w_flat, b_vec)

    # Single dense unpack: drop pad lanes, un-interleave the g images per
    # plane, keep the valid (oh, ow) window of each image.
    out = (out_packed[:, :, :g * w]
           .reshape(n_blk, oh, g, w)
           .transpose(0, 2, 1, 3)
           .reshape(n_pad, oh, w)[:n, :, :ow])
    return out[0] if squeeze else out


def corr2d_ref(x, k):
    """Pure-JAX reference of the PyTorch corr2d loop."""
    kh, kw = k.shape
    oh, ow = x.shape[0] - kh + 1, x.shape[1] - kw + 1
    out = jnp.zeros((oh, ow), jnp.float32)
    for i in range(kh):
        for j in range(kw):
            out = out + x[i:i + oh, j:j + ow] * k[i, j]
    return out


if __name__ == "__main__":
    key = jax.random.PRNGKey(0)
    k_w, k_b, k_x1, k_x2 = jax.random.split(key, 4)

    conv2d = jax.jit(conv2d_pallas)

    # 1) Exact module scenario: Conv2D(kernel_size=(1, 2)) on X = ones(6, 8).
    weight = jax.random.normal(k_w, (1, 2), dtype=jnp.float32)
    bias = jax.random.normal(k_b, (1,), dtype=jnp.float32)
    x = jnp.ones((6, 8), dtype=jnp.float32)
    out = conv2d(x, weight, bias)
    jax.block_until_ready(out)
    expected = corr2d_ref(x, weight) + bias[0]
    assert out.shape == (6, 7), out.shape
    assert jnp.allclose(out, expected, atol=1e-5), (out, expected)

    # Edge-detection kernel from the original script: K = [[1, -1]] on ones.
    k_edge = jnp.array([[1.0, -1.0]], dtype=jnp.float32)
    out_edge = conv2d(x, k_edge, bias)
    jax.block_until_ready(out_edge)
    assert jnp.allclose(out_edge, jnp.full((6, 7), bias[0]), atol=1e-5)

    # 2) Batched use: 64 images packed 16-per-plane, 2 "parallel" grid steps.
    xb = jax.random.normal(k_x1, (64, 6, 8), dtype=jnp.float32)
    outb = conv2d(xb, weight, bias)
    jax.block_until_ready(outb)
    expb = jnp.stack([corr2d_ref(xi, weight) for xi in xb]) + bias[0]
    assert outb.shape == (64, 6, 7), outb.shape
    assert jnp.allclose(outb, expb, atol=1e-5)

    # 3) Larger kernel exercises sublane-offset row taps + per-row accumulators.
    w33 = jax.random.normal(k_w, (3, 3), dtype=jnp.float32)
    xc = jax.random.normal(k_x2, (4, 10, 12), dtype=jnp.float32)
    outc = conv2d(xc, w33, bias)
    jax.block_until_ready(outc)
    expc = jnp.stack([corr2d_ref(xi, w33) for xi in xc]) + bias[0]
    assert outc.shape == (4, 8, 10), outc.shape
    assert jnp.allclose(outc, expc, atol=1e-4, rtol=1e-4)

    print("KERNEL_OK")
</pallas_src>

<mosaic_0001>
module attributes {stable_mosaic.version = 11 : i64} {
  func.func @corr2d_kernel(%arg0: i32, %arg1: memref<1x6x128xf32, #tpu.memory_space<vmem>>, %arg2: memref<2xf32, #tpu.memory_space<smem>>, %arg3: memref<1xf32, #tpu.memory_space<smem>>, %arg4: memref<1x6x128xf32, #tpu.memory_space<vmem>>) attributes {dimension_semantics = [#tpu.dimension_semantics<parallel>], iteration_bounds = array<i64: 1>, scalar_prefetch = 0 : i64, scratch_operands = 0 : i64, tpu.core_type = #tpu.core_type<tc>, window_params = [{transform_indices = @transform_0, window_bounds = array<i64: 1, 6, 128>}, {transform_indices = @transform_1, window_bounds = array<i64: 2>}, {transform_indices = @transform_2, window_bounds = array<i64: 1>}, {transform_indices = @transform_3, window_bounds = array<i64: 1, 6, 128>}]} {
    %c0 = arith.constant 0 : index
    %0 = memref.load %arg3[%c0] : memref<1xf32, #tpu.memory_space<smem>>
    %c0_i32 = arith.constant 0 : i32
    %c1_i32 = arith.constant 1 : i32
    %1 = arith.muli %c0_i32, %c1_i32 : i32
    %c0_i32_0 = arith.constant 0 : i32
    %2 = arith.addi %c0_i32_0, %1 : i32
    %c1_i32_1 = arith.constant 1 : i32
    %3 = arith.muli %2, %c1_i32_1 : i32
    %4 = tpu.assume_multiple %3, 1 : i32
    %c0_i32_2 = arith.constant 0 : i32
    %5 = arith.addi %4, %c0_i32_2 : i32
    %6 = arith.index_cast %5 : i32 to index
    %c0_3 = arith.constant 0 : index
    %c0_4 = arith.constant 0 : index
    %7 = vector.load %arg1[%6, %c0_3, %c0_4] : memref<1x6x128xf32, #tpu.memory_space<vmem>>, vector<1x6x128xf32>
    %8 = vector.shape_cast %7 : vector<1x6x128xf32> to vector<6x128xf32>
    %c0_5 = arith.constant 0 : index
    %9 = memref.load %arg2[%c0_5] : memref<2xf32, #tpu.memory_space<smem>>
    %10 = vector.broadcast %9 : f32 to vector<6x128xf32>
    %11 = arith.mulf %8, %10 : vector<6x128xf32>
    %c127_i32 = arith.constant 127 : i32
    %12 = tpu.dynamic_rotate %8 by %c127_i32 dim 1 : vector<6x128xf32>, i32 -> vector<6x128xf32>
    %c1 = arith.constant 1 : index
    %13 = memref.load %arg2[%c1] : memref<2xf32, #tpu.memory_space<smem>>
    %14 = vector.broadcast %13 : f32 to vector<6x128xf32>
    %15 = arith.mulf %12, %14 : vector<6x128xf32>
    %16 = arith.addf %11, %15 : vector<6x128xf32>
    %17 = vector.broadcast %0 : f32 to vector<6x128xf32>
    %18 = arith.addf %16, %17 : vector<6x128xf32>
    %19 = arith.index_cast %5 : i32 to index
    %c0_6 = arith.constant 0 : index
    %c0_7 = arith.constant 0 : index
    %20 = vector.load %arg4[%19, %c0_6, %c0_7] : memref<1x6x128xf32, #tpu.memory_space<vmem>>, vector<1x6x128xf32>
    %21 = vector.shape_cast %20 : vector<1x6x128xf32> to vector<6x128xf32>
    %22 = vector.shape_cast %18 : vector<6x128xf32> to vector<1x6x128xf32>
    tpu.vector_store %arg4[%19, %c0_6, %c0_7], %22 {strides = array<i32>} : memref<1x6x128xf32, #tpu.memory_space<vmem>>, vector<1x6x128xf32>,
    %c1_i32_8 = arith.constant 1 : i32
    return
  }
  func.func @transform_0(%arg0: i32) -> (i32, i32, i32) {
    %c0_i32 = arith.constant 0 : i32
    %c0_i32_0 = arith.constant 0 : i32
    %c0_i32_1 = arith.constant 0 : i32
    return %arg0, %c0_i32, %c0_i32_0 : i32, i32, i32
  }
  func.func @transform_1(%arg0: i32) -> i32 {
    %c0_i32 = arith.constant 0 : i32
    %c0_i32_0 = arith.constant 0 : i32
    return %c0_i32 : i32
  }
  func.func @transform_2(%arg0: i32) -> i32 {
    %c0_i32 = arith.constant 0 : i32
    %c0_i32_0 = arith.constant 0 : i32
    return %c0_i32 : i32
  }
  func.func @transform_3(%arg0: i32) -> (i32, i32, i32) {
    %c0_i32 = arith.constant 0 : i32
    %c0_i32_0 = arith.constant 0 : i32
    %c0_i32_1 = arith.constant 0 : i32
    return %arg0, %c0_i32, %c0_i32_0 : i32, i32, i32
  }
}

</mosaic_0001>

<llo_original>
// kernel: conv2d_pallas.1
$region0: #{conv2d_pallas.1}
  #allocation0 [shape = 'u32[]', space=smem, size = 0x4, offset = 0x4, fixed_abs, tag = 'smem constant byte address 0x4 - core index']
  #allocation1 [shape = 'u32[144,128]{1,0:T(1,128)}', space=vmem, size = 0x12000, scoped, tag = 'internal scratch']
  #allocation2 [shape = 'f32[1]{0:T(128)S(6)}', space=smem, size = 0x200, scoped, tag = 'scoped memory for conv2d_pallas.1']
  %s0 = inlined_call_operand.vmem [shape: f32[1,6,128], index: 0, kind: input, shape index: {}]
  %s1 = inlined_call_operand.vmem [shape: f32[2], index: 1, kind: input, shape index: {}]
  %s2 = inlined_call_operand.<no memory space> [shape: f32[1], index: 2, kind: input, shape index: {}]
  %s3 = inlined_call_operand.vmem [shape: f32[1,6,128], index: 3, kind: output, shape index: {}]
  %s4 = sld [smem:[#allocation0]]
  $region26: #{conv2d_pallas.1} parent=0
    _
  %s6 = ssub.s32 1, %s4
  %s7 = scalar_select 0, %s6, %s4
  %8 = sst [smem:[#allocation2]] %s2
  $region1: #{conv2d_pallas.1} parent=0
    #allocation3 [shape = 'u8[512]{0}', space=smem, size = 0x200, scoped, tag = 'input window, operand 1, single buffered']
    #allocation4 [shape = 's32[1]{0}', space=sflag, size = 0x4, scoped, tag = 'scoped memory for conv2d_pallas.1']
    %9 = vsyncpa [#allocation4], 0
    // Predicated region
    $region2: #{conv2d_pallas.1} parent=1 // pred_check
      _
    $region3: #{conv2d_pallas.1} parent=1 // pred_check_branch
      %11 = sbr.rel (0) target = $region5
    $region4: #{conv2d_pallas.1} parent=1 // pred_region
      _
    $region5: #{conv2d_pallas.1} parent=1 // pred_fallthru
      _
    // Predicated region
    $region6: #{conv2d_pallas.1} parent=1 // pred_check
      _
    $region7: #{conv2d_pallas.1} parent=1 // pred_check_branch
      %13 = sbr.rel (0) target = $region9
    $region8: #{conv2d_pallas.1} parent=1 // pred_region
      %s15 = ssub.s32 16, 16
      %16 = vsyncadd [#allocation4], %s15
      %s18 = sshll.u32 %s1, 4
      %s19 = int_to_ptr.vmem [resolvable:$true] %s18
      %21 = dma.vmem_to_smem %s19, 16, [#allocation3], [#allocation4]
    $region9: #{conv2d_pallas.1} parent=1 // pred_fallthru
      _
    // Predicated region
    $region10: #{conv2d_pallas.1} parent=1 // pred_check
      _
    $region11: #{conv2d_pallas.1} parent=1 // pred_check_branch
      %23 = sbr.rel (0) target = $region13
    $region12: #{conv2d_pallas.1} parent=1 // pred_region
      _
    $region13: #{conv2d_pallas.1} parent=1 // pred_fallthru
      _
    // Predicated region
    $region14: #{conv2d_pallas.1} parent=1 // pred_check
      _
    $region15: #{conv2d_pallas.1} parent=1 // pred_check_branch
      %25 = sbr.rel (0) target = $region17
    $region16: #{conv2d_pallas.1} parent=1 // pred_region
      %26 = dma.done [#allocation4], 16
    $region17: #{conv2d_pallas.1} parent=1 // pred_fallthru
      _
    %27 = sfence
    %s28 = sld [smem:[#allocation2]]
    %s29 = smul.u32 0, 8
    %s30 = scalar_lea.vmem %s0, %s29
    %v31 = vld [vmem:[%s30] sm:$0x3f]
    %s32 = sld [smem:[#allocation3]]
    %v33 = vstv %s32
    %v34 = vmul.f32 %v31, %v33
    %35 = vrot.lane.b32.xlu0 %v31, 127
    %v36 = vpop.permute.xlu0 %35
    %s37 = sld [smem:[#allocation3 + $0x1]]
    %v38 = vstv %s37
    %v39 = vmul.f32 %v36, %v38
    %v40 = vadd.f32 %v34, %v39
    %v41 = vstv %s28
    %v42 = vadd.f32 %v40, %v41
    %s43 = scalar_lea.vmem %s3, %s29
    %44 = vst [vmem:[%s43] sm:$0x3f] %v42
    // Predicated region
    $region18: #{conv2d_pallas.1} parent=1 // pred_check
      _
    $region19: #{conv2d_pallas.1} parent=1 // pred_check_branch
      %46 = sbr.rel (0) target = $region21
    $region20: #{conv2d_pallas.1} parent=1 // pred_region
      _
    $region21: #{conv2d_pallas.1} parent=1 // pred_fallthru
      _
    // Predicated region
    $region22: #{conv2d_pallas.1} parent=1 // pred_check
      _
    $region23: #{conv2d_pallas.1} parent=1 // pred_check_branch
      %48 = sbr.rel (0) target = $region25
    $region24: #{conv2d_pallas.1} parent=1 // pred_region
      _
    $region25: #{conv2d_pallas.1} parent=1 // pred_fallthru
      _
    %49 = vsyncpa [#allocation4], 1

</llo_original>
